<compile_context>
chip_gen: v7x
topology: tpu7x:2x2x1
jax: 0.10.0
libtpu: 0.0.40
codegen_flags: <defaults>
</compile_context>

<pallas_src>
import jax
import jax.numpy as jnp
from jax.experimental import pallas as pl
from jax.experimental.pallas import tpu as pltpu


def _round_up(x, m):
    return ((x + m - 1) // m) * m


def mlp_kernel(xt_ref, w1_ref, b1_ref, w2_ref, b2_ref, w3_ref, b3_ref, o_ref):
    # Fused Linear -> ReLU -> Linear -> ReLU -> Linear on one [D, tile_b]
    # column tile (batch on the lane axis).  All matmuls accumulate in f32.
    xt = xt_ref[...]                                                    # [D, tile_b] bf16
    h1 = jnp.dot(w1_ref[...], xt, preferred_element_type=jnp.float32) + b1_ref[...]
    h1 = jnp.maximum(h1, 0.0)                                           # [H, tile_b]
    h2 = jnp.dot(w2_ref[...], h1, preferred_element_type=jnp.float32) + b2_ref[...]
    h2 = jnp.maximum(h2, 0.0)                                           # [H, tile_b]
    out = jnp.dot(w3_ref[...], h2, preferred_element_type=jnp.float32) + b3_ref[...]
    o_ref[...] = out.astype(o_ref.dtype)                                # [1, tile_b] lane-dense


def mlp_forward(x, params, *, tile_b=4096, stream_dtype=jnp.bfloat16):
    """Fused MLP forward. x: [B, D]; params in torch nn.Linear layout (W[out,in], b[out])."""
    w1, b1, w2, b2, w3, b3 = params
    B, D = x.shape
    H = w1.shape[0]

    # Batch tile: multiple of 128 lanes; cap so the grid keeps >= 2 steps when
    # B is big enough (lets dimension_semantics=("parallel",) use both v7x TCs).
    tile_b = _round_up(min(tile_b, max(pl.cdiv(B, 2), 128)), 128)
    B_pad = _round_up(B, tile_b)
    grid = (B_pad // tile_b,)

    # Wrapper-side layout plumbing: pad the batch, put it on the lane axis,
    # stream as bf16.  Biases become columns so they lane-broadcast in-kernel.
    xt = jnp.zeros((D, B_pad), stream_dtype).at[:, :B].set(x.astype(stream_dtype).T)
    w1f = w1.astype(jnp.float32)
    w2f = w2.astype(jnp.float32)
    w3f = w3.astype(jnp.float32)
    b1c = b1.reshape(H, 1).astype(jnp.float32)
    b2c = b2.reshape(H, 1).astype(jnp.float32)
    b3c = b3.reshape(1, 1).astype(jnp.float32)

    full = lambda a: pl.BlockSpec(a.shape, lambda i: (0,) * a.ndim)

    itemsize = jnp.dtype(stream_dtype).itemsize
    weight_bytes = 4 * (D * H + H + H * H + H + H + 1)
    cost = pl.CostEstimate(
        flops=2 * B_pad * (D * H + H * H + H),
        transcendentals=0,
        bytes_accessed=B_pad * D * itemsize + weight_bytes + B_pad * 4,
    )

    out = pl.pallas_call(
        mlp_kernel,
        out_shape=jax.ShapeDtypeStruct((1, B_pad), jnp.float32),
        grid_spec=pltpu.PrefetchScalarGridSpec(
            num_scalar_prefetch=0,
            grid=grid,
            in_specs=[
                pl.BlockSpec((D, tile_b), lambda i: (0, i)),   # x^T tile, lane-dense
                full(w1f), full(b1c),
                full(w2f), full(b2c),
                full(w3f), full(b3c),
            ],
            out_specs=pl.BlockSpec((1, tile_b), lambda i: (0, i)),  # lane-dense output
        ),
        compiler_params=pltpu.CompilerParams(
            dimension_semantics=("parallel",),
        ),
        cost_estimate=cost,
    )(xt, w1f, b1c, w2f, b2c, w3f, b3c)

    return out[0, :B].reshape(B, 1)


def init_params(key, input_dim, hidden_dim=16):
    """Deterministic synthetic params in PyTorch nn.Linear layout: W[out,in], b[out]."""
    k1, k2, k3, k4, k5, k6 = jax.random.split(key, 6)
    w1 = jax.random.normal(k1, (hidden_dim, input_dim), jnp.float32) * 0.1
    b1 = jax.random.normal(k2, (hidden_dim,), jnp.float32) * 0.1
    w2 = jax.random.normal(k3, (hidden_dim, hidden_dim), jnp.float32) * 0.1
    b2 = jax.random.normal(k4, (hidden_dim,), jnp.float32) * 0.1
    w3 = jax.random.normal(k5, (1, hidden_dim), jnp.float32) * 0.1
    b3 = jax.random.normal(k6, (1,), jnp.float32) * 0.1
    return (w1, b1, w2, b2, w3, b3)


def mlp_reference(x, params):
    w1, b1, w2, b2, w3, b3 = params
    h1 = jnp.maximum(x @ w1.T + b1, 0.0)
    h2 = jnp.maximum(h1 @ w2.T + b2, 0.0)
    return h2 @ w3.T + b3


if __name__ == "__main__":
    key = jax.random.PRNGKey(0)
    kx, kp = jax.random.split(key)

    B, D, H = 8, 32, 16  # batch, input_dim, hidden_dim (small test shapes)
    x = jax.random.normal(kx, (B, D), jnp.float32)
    params = init_params(kp, D, H)

    out = jax.block_until_ready(mlp_forward(x, params))
    assert out.shape == (B, 1)

    # Tight check vs a reference fed the same bf16-rounded x (f32 math).
    x_rt = x.astype(jnp.bfloat16).astype(jnp.float32)
    ref_bf = mlp_reference(x_rt, params)
    assert jnp.allclose(out, ref_bf, atol=1e-4, rtol=1e-4), "mismatch vs bf16-input reference"

    # Loose sanity check vs pure-f32 torch semantics (x is streamed as bf16).
    ref = mlp_reference(x, params)
    assert jnp.allclose(out, ref, atol=2e-2, rtol=2e-2), "mismatch vs f32 reference"

    print("KERNEL_OK")
</pallas_src>

<mosaic_0001>
module attributes {stable_mosaic.version = 11 : i64} {
  func.func @mlp_kernel(%arg0: i32, %arg1: memref<32x128xbf16, #tpu.memory_space<vmem>>, %arg2: memref<16x32xf32, #tpu.memory_space<vmem>>, %arg3: memref<16x1xf32, #tpu.memory_space<vmem>>, %arg4: memref<16x16xf32, #tpu.memory_space<vmem>>, %arg5: memref<16x1xf32, #tpu.memory_space<vmem>>, %arg6: memref<1x16xf32, #tpu.memory_space<vmem>>, %arg7: memref<1x1xf32, #tpu.memory_space<vmem>>, %arg8: memref<1x128xf32, #tpu.memory_space<vmem>>) attributes {dimension_semantics = [#tpu.dimension_semantics<parallel>], iteration_bounds = array<i64: 1>, scalar_prefetch = 0 : i64, scratch_operands = 0 : i64, tpu.core_type = #tpu.core_type<tc>, window_params = [{transform_indices = @transform_0, window_bounds = array<i64: 32, 128>}, {pipeline_mode = #tpu.pipeline_mode<synchronous>, transform_indices = @transform_1, window_bounds = array<i64: 16, 32>}, {pipeline_mode = #tpu.pipeline_mode<synchronous>, transform_indices = @transform_2, window_bounds = array<i64: 16, 1>}, {pipeline_mode = #tpu.pipeline_mode<synchronous>, transform_indices = @transform_3, window_bounds = array<i64: 16, 16>}, {pipeline_mode = #tpu.pipeline_mode<synchronous>, transform_indices = @transform_4, window_bounds = array<i64: 16, 1>}, {pipeline_mode = #tpu.pipeline_mode<synchronous>, transform_indices = @transform_5, window_bounds = array<i64: 1, 16>}, {pipeline_mode = #tpu.pipeline_mode<synchronous>, transform_indices = @transform_6, window_bounds = array<i64: 1, 1>}, {transform_indices = @transform_7, window_bounds = array<i64: 1, 128>}]} {
    %c0 = arith.constant 0 : index
    %c0_0 = arith.constant 0 : index
    %0 = vector.load %arg1[%c0, %c0_0] : memref<32x128xbf16, #tpu.memory_space<vmem>>, vector<32x128xbf16>
    %c0_1 = arith.constant 0 : index
    %c0_2 = arith.constant 0 : index
    %1 = vector.load %arg2[%c0_1, %c0_2] : memref<16x32xf32, #tpu.memory_space<vmem>>, vector<16x32xf32>
    %cst = arith.constant dense<0.000000e+00> : vector<16x128xf32>
    %2 = tpu.matmul %1, %0, %cst {dimension_numbers = #tpu.dot_dimension_numbers<[1], [0], [0], [1], [0, 0, 1, 1], [], []>} : vector<16x32xf32>, vector<32x128xbf16>, vector<16x128xf32> -> vector<16x128xf32>
    %c0_3 = arith.constant 0 : index
    %c0_4 = arith.constant 0 : index
    %3 = vector.load %arg3[%c0_3, %c0_4] : memref<16x1xf32, #tpu.memory_space<vmem>>, vector<16x1xf32>
    %4 = vector.broadcast %3 : vector<16x1xf32> to vector<16x128xf32>
    %5 = arith.addf %2, %4 : vector<16x128xf32>
    %cst_5 = arith.constant 0.000000e+00 : f32
    %6 = vector.broadcast %cst_5 : f32 to vector<16x128xf32>
    %7 = arith.maximumf %5, %6 : vector<16x128xf32>
    %c0_6 = arith.constant 0 : index
    %c0_7 = arith.constant 0 : index
    %8 = vector.load %arg4[%c0_6, %c0_7] : memref<16x16xf32, #tpu.memory_space<vmem>>, vector<16x16xf32>
    %cst_8 = arith.constant dense<0.000000e+00> : vector<16x128xf32>
    %9 = tpu.matmul %8, %7, %cst_8 {dimension_numbers = #tpu.dot_dimension_numbers<[1], [0], [0], [1], [0, 0, 1, 1], [], []>} : vector<16x16xf32>, vector<16x128xf32>, vector<16x128xf32> -> vector<16x128xf32>
    %c0_9 = arith.constant 0 : index
    %c0_10 = arith.constant 0 : index
    %10 = vector.load %arg5[%c0_9, %c0_10] : memref<16x1xf32, #tpu.memory_space<vmem>>, vector<16x1xf32>
    %11 = vector.broadcast %10 : vector<16x1xf32> to vector<16x128xf32>
    %12 = arith.addf %9, %11 : vector<16x128xf32>
    %cst_11 = arith.constant 0.000000e+00 : f32
    %13 = vector.broadcast %cst_11 : f32 to vector<16x128xf32>
    %14 = arith.maximumf %12, %13 : vector<16x128xf32>
    %c0_12 = arith.constant 0 : index
    %c0_13 = arith.constant 0 : index
    %15 = vector.load %arg6[%c0_12, %c0_13] : memref<1x16xf32, #tpu.memory_space<vmem>>, vector<1x16xf32>
    %cst_14 = arith.constant dense<0.000000e+00> : vector<1x128xf32>
    %16 = tpu.matmul %15, %14, %cst_14 {dimension_numbers = #tpu.dot_dimension_numbers<[1], [0], [0], [1], [0, 0, 1, 1], [], []>} : vector<1x16xf32>, vector<16x128xf32>, vector<1x128xf32> -> vector<1x128xf32>
    %c0_15 = arith.constant 0 : index
    %c0_16 = arith.constant 0 : index
    %17 = vector.load %arg7[%c0_15, %c0_16] : memref<1x1xf32, #tpu.memory_space<vmem>>, vector<1x1xf32>
    %18 = vector.broadcast %17 : vector<1x1xf32> to vector<1x128xf32>
    %19 = arith.addf %16, %18 : vector<1x128xf32>
    %c0_17 = arith.constant 0 : index
    %c0_18 = arith.constant 0 : index
    %20 = vector.load %arg8[%c0_17, %c0_18] : memref<1x128xf32, #tpu.memory_space<vmem>>, vector<1x128xf32>
    tpu.vector_store %arg8[%c0_17, %c0_18], %19 {strides = array<i32>} : memref<1x128xf32, #tpu.memory_space<vmem>>, vector<1x128xf32>,
    return
  }
  func.func @transform_0(%arg0: i32) -> (i32, i32) {
    %c0_i32 = arith.constant 0 : i32
    %c0_i32_0 = arith.constant 0 : i32
    return %c0_i32, %arg0 : i32, i32
  }
  func.func @transform_1(%arg0: i32) -> (i32, i32) {
    %c0_i32 = arith.constant 0 : i32
    %c0_i32_0 = arith.constant 0 : i32
    %c0_i32_1 = arith.constant 0 : i32
    return %c0_i32, %c0_i32_0 : i32, i32
  }
  func.func @transform_2(%arg0: i32) -> (i32, i32) {
    %c0_i32 = arith.constant 0 : i32
    %c0_i32_0 = arith.constant 0 : i32
    %c0_i32_1 = arith.constant 0 : i32
    return %c0_i32, %c0_i32_0 : i32, i32
  }
  func.func @transform_3(%arg0: i32) -> (i32, i32) {
    %c0_i32 = arith.constant 0 : i32
    %c0_i32_0 = arith.constant 0 : i32
    %c0_i32_1 = arith.constant 0 : i32
    return %c0_i32, %c0_i32_0 : i32, i32
  }
  func.func @transform_4(%arg0: i32) -> (i32, i32) {
    %c0_i32 = arith.constant 0 : i32
    %c0_i32_0 = arith.constant 0 : i32
    %c0_i32_1 = arith.constant 0 : i32
    return %c0_i32, %c0_i32_0 : i32, i32
  }
  func.func @transform_5(%arg0: i32) -> (i32, i32) {
    %c0_i32 = arith.constant 0 : i32
    %c0_i32_0 = arith.constant 0 : i32
    %c0_i32_1 = arith.constant 0 : i32
    return %c0_i32, %c0_i32_0 : i32, i32
  }
  func.func @transform_6(%arg0: i32) -> (i32, i32) {
    %c0_i32 = arith.constant 0 : i32
    %c0_i32_0 = arith.constant 0 : i32
    %c0_i32_1 = arith.constant 0 : i32
    return %c0_i32, %c0_i32_0 : i32, i32
  }
  func.func @transform_7(%arg0: i32) -> (i32, i32) {
    %c0_i32 = arith.constant 0 : i32
    %c0_i32_0 = arith.constant 0 : i32
    return %c0_i32, %arg0 : i32, i32
  }
}

</mosaic_0001>

<llo_original>
// kernel: tpu_custom_call.1
$region0: #{tpu_custom_call.1}
  #allocation0 [shape = 'u32[]', space=smem, size = 0x4, offset = 0x4, fixed_abs, tag = 'smem constant byte address 0x4 - core index']
  #allocation1 [shape = 'u32[144,128]{1,0:T(1,128)}', space=vmem, size = 0x12000, scoped, tag = 'internal scratch']
  #allocation2 [shape = 'f32[1,1]{1,0:T(1,128)S(1)}', space=vmem, size = 0x200, scoped, tag = 'scoped memory for tpu_custom_call.1']
  %s0 = inlined_call_operand.vmem [shape: bf16[32,128], index: 0, kind: input, shape index: {}]
  %s1 = inlined_call_operand.vmem [shape: f32[16,32], index: 1, kind: input, shape index: {}]
  %s2 = inlined_call_operand.vmem [shape: f32[16,1], index: 2, kind: input, shape index: {}]
  %s3 = inlined_call_operand.vmem [shape: f32[16,16], index: 3, kind: input, shape index: {}]
  %s4 = inlined_call_operand.vmem [shape: f32[16,1], index: 4, kind: input, shape index: {}]
  %s5 = inlined_call_operand.vmem [shape: f32[1,16], index: 5, kind: input, shape index: {}]
  %s6 = inlined_call_operand.<no memory space> [shape: f32[1,1], index: 6, kind: input, shape index: {}]
  %s7 = inlined_call_operand.hbm [shape: f32[1,128], index: 7, kind: output, shape index: {}]
  %s8 = sld [smem:[#allocation0]]
  $region38: #{tpu_custom_call.1} parent=0
    _
  %s10 = ssub.s32 1, %s8
  %s11 = scalar_select 0, %s10, %s8
  %v12 = vstv %s6
  %13 = vst [vmem:[#allocation2] sm:$0x1] %v12
  $region1: #{tpu_custom_call.1} parent=0
    #allocation3 [shape = 'u8[512]{0}', space=vmem, size = 0x400, scoped, tag = 'output window, operand 0, single buffered']
    #allocation4 [shape = 's32[1]{0}', space=sflag, size = 0x4, scoped, tag = 'scoped memory for tpu_custom_call.1']
    %14 = vsyncpa [#allocation4], 0
    // Predicated region
    $region2: #{tpu_custom_call.1} parent=1 // pred_check
      _
    $region3: #{tpu_custom_call.1} parent=1 // pred_check_branch
      %16 = sbr.rel (0) target = $region5
    $region4: #{tpu_custom_call.1} parent=1 // pred_region
      _
    $region5: #{tpu_custom_call.1} parent=1 // pred_fallthru
      _
    // Predicated region
    $region6: #{tpu_custom_call.1} parent=1 // pred_check
      _
    $region7: #{tpu_custom_call.1} parent=1 // pred_check_branch
      %18 = sbr.rel (0) target = $region9
    $region8: #{tpu_custom_call.1} parent=1 // pred_region
      _
    $region9: #{tpu_custom_call.1} parent=1 // pred_fallthru
      _
    // Predicated region
    $region10: #{tpu_custom_call.1} parent=1 // pred_check
      _
    $region11: #{tpu_custom_call.1} parent=1 // pred_check_branch
      %20 = sbr.rel (0) target = $region13
    $region12: #{tpu_custom_call.1} parent=1 // pred_region
      _
    $region13: #{tpu_custom_call.1} parent=1 // pred_fallthru
      _
    // Predicated region
    $region14: #{tpu_custom_call.1} parent=1 // pred_check
      _
    $region15: #{tpu_custom_call.1} parent=1 // pred_check_branch
      %22 = sbr.rel (0) target = $region17
    $region16: #{tpu_custom_call.1} parent=1 // pred_region
      _
    $region17: #{tpu_custom_call.1} parent=1 // pred_fallthru
      _
    // Predicated region
    $region18: #{tpu_custom_call.1} parent=1 // pred_check
      _
    $region19: #{tpu_custom_call.1} parent=1 // pred_check_branch
      %24 = sbr.rel (0) target = $region21
    $region20: #{tpu_custom_call.1} parent=1 // pred_region
      _
    $region21: #{tpu_custom_call.1} parent=1 // pred_fallthru
      _
    // Predicated region
    $region22: #{tpu_custom_call.1} parent=1 // pred_check
      _
    $region23: #{tpu_custom_call.1} parent=1 // pred_check_branch
      %26 = sbr.rel (0) target = $region25
    $region24: #{tpu_custom_call.1} parent=1 // pred_region
      _
    $region25: #{tpu_custom_call.1} parent=1 // pred_fallthru
      _
    // Predicated region
    $region26: #{tpu_custom_call.1} parent=1 // pred_check
      _
    $region27: #{tpu_custom_call.1} parent=1 // pred_check_branch
      %28 = sbr.rel (0) target = $region29
    $region28: #{tpu_custom_call.1} parent=1 // pred_region
      _
    $region29: #{tpu_custom_call.1} parent=1 // pred_fallthru
      _
    %v30 = vld [vmem:[%s0] sm:$0xf]
    %v31 = vld [vmem:[%s0 + $0x4] sm:$0xf]
    %v32 = vld [vmem:[%s0 + $0x8] sm:$0xf]
    %v33 = vld [vmem:[%s0 + $0xc] sm:$0xf]
    %v34 = vld [vmem:[%s1] sm:$0xff]
    %v35 = vld [vmem:[%s1 + $0x8] sm:$0xff]
    %v36 = vld [vmem:[%s2] sm:$0xff]
    %v37 = vld [vmem:[%s2 + $0x8] sm:$0xff]
    %39 = vset.pattern.permute.xlu0 0
    %40 = vperm.xlu0 %39, %v36
    %v41 = vpop.permute.xlu0 %40
    %44 = vset.pattern.permute.xlu0 0
    %45 = vperm.xlu0 %44, %v37
    %v46 = vpop.permute.xlu0 %45
    %v52 = vunpack.c.l.b16 %v30
    %v53 = vunpack.c.l.b16 %v31
    %v54 = vunpack.c.l.b16 %v32
    %v55 = vunpack.c.l.b16 %v33
    %v56 = vpack.c.b16 %v53, %v52
    %v57 = vpack.c.b16 %v55, %v54
    %vm60 = vcmask 261120
    %v62 = vsel %vm60, %v34, 0
    %v65 = vsel %vm60, %v35, 0
    %67 = vmatprep.subr.bf16.mxu0 0
    %68 = vmatpush1.bf16.msra.mxu0 %v56
    %69 = vmatprep.subr.bf16.mxu0 0
    %70 = vmatpush1.bf16.msra.mxu0 %v57
    %71 = vmatprep.subr.bf16.mxu0 0
    %72 = vmatpush1.bf16.msra.mxu0 0
    %73 = vmatprep.subr.bf16.mxu0 0
    %74 = vmatpush1.bf16.msra.mxu0 0
    %75 = vmatprep.subr.bf16.mxu0 0
    %76 = vmatpush1.bf16.msra.mxu0 0
    %77 = vmatprep.subr.bf16.mxu0 0
    %78 = vmatpush1.bf16.msra.mxu0 0
    %79 = vmatprep.subr.bf16.mxu0 0
    %80 = vmatpush1.bf16.msra.mxu0 0
    %81 = vmatprep.subr.bf16.mxu0 0
    %82 = vmatpush1.bf16.msra.mxu0 0
    %83 = vmatprep.subr.bf16.mxu0 0
    %84 = vmatpush1.bf16.msra.mxu0 0
    %85 = vmatprep.subr.bf16.mxu0 0
    %86 = vmatpush1.bf16.msra.mxu0 0
    %87 = vmatprep.subr.bf16.mxu0 0
    %88 = vmatpush1.bf16.msra.mxu0 0
    %89 = vmatprep.subr.bf16.mxu0 0
    %90 = vmatpush1.bf16.msra.mxu0 0
    %91 = vmatprep.subr.bf16.mxu0 0
    %92 = vmatpush1.bf16.msra.mxu0 0
    %93 = vmatprep.subr.bf16.mxu0 0
    %94 = vmatpush1.bf16.msra.mxu0 0
    %95 = vmatprep.subr.bf16.mxu0 0
    %96 = vmatpush1.bf16.msra.mxu0 0
    %97 = vmatprep.subr.bf16.mxu0 0
    %98 = vmatpush1.bf16.msra.mxu0 0
    %99 = vmatprep.mubr.f32.mxu0 0.0
    %100 = vmatmul.mubr.f32.gmra.mrb[0].mxu0 %v62
    %v101 = vpop.f32.mrb[0].mxu0
    %v102 = vadd.f32 %v41, %v101
    %v103 = vpop.f32.mrb[0].mxu0
    %104 = vmatprep.mubr.f32.mxu0 0.0
    %105 = vmatmul.mubr.f32.gmra.mrb[0].mxu0 %v65
    %v106 = vpop.f32.mrb[0].mxu0
    %v107 = vadd.f32 %v46, %v106
    %v108 = vpop.f32.mrb[0].mxu0
    %109 = vdwg.mxu0
    %v110 = vmax.f32 %v102, 0.0
    %v111 = vmax.f32 %v107, 0.0
    %v112 = vld [vmem:[%s3] sm:$0xff]
    %v113 = vld [vmem:[%s3 + $0x8] sm:$0xff]
    %v114 = vld [vmem:[%s4] sm:$0xff]
    %v115 = vld [vmem:[%s4 + $0x8] sm:$0xff]
    %117 = vset.pattern.permute.xlu0 0
    %118 = vperm.xlu0 %117, %v114
    %v119 = vpop.permute.xlu0 %118
    %122 = vset.pattern.permute.xlu0 0
    %123 = vperm.xlu0 %122, %v115
    %v124 = vpop.permute.xlu0 %123
    %vm126 = vcmask 130048
    %v128 = vsel %vm126, %v112, 0
    %v131 = vsel %vm126, %v113, 0
    %133 = vmatprep.subr.mxu0 0.0
    %134 = vmatpush1.msra.mxu0 %v110
    %135 = vmatprep.subr.mxu0 0.0
    %136 = vmatpush1.msra.mxu0 %v111
    %137 = vmatprep.subr.mxu0 0.0
    %138 = vmatpush1.msra.mxu0 0.0
    %139 = vmatprep.subr.mxu0 0.0
    %140 = vmatpush1.msra.mxu0 0.0
    %141 = vmatprep.subr.mxu0 0.0
    %142 = vmatpush1.msra.mxu0 0.0
    %143 = vmatprep.subr.mxu0 0.0
    %144 = vmatpush1.msra.mxu0 0.0
    %145 = vmatprep.subr.mxu0 0.0
    %146 = vmatpush1.msra.mxu0 0.0
    %147 = vmatprep.subr.mxu0 0.0
    %148 = vmatpush1.msra.mxu0 0.0
    %149 = vmatprep.subr.mxu0 0.0
    %150 = vmatpush1.msra.mxu0 0.0
    %151 = vmatprep.subr.mxu0 0.0
    %152 = vmatpush1.msra.mxu0 0.0
    %153 = vmatprep.subr.mxu0 0.0
    %154 = vmatpush1.msra.mxu0 0.0
    %155 = vmatprep.subr.mxu0 0.0
    %156 = vmatpush1.msra.mxu0 0.0
    %157 = vmatprep.subr.mxu0 0.0
    %158 = vmatpush1.msra.mxu0 0.0
    %159 = vmatprep.subr.mxu0 0.0
    %160 = vmatpush1.msra.mxu0 0.0
    %161 = vmatprep.subr.mxu0 0.0
    %162 = vmatpush1.msra.mxu0 0.0
    %163 = vmatprep.subr.mxu0 0.0
    %164 = vmatpush1.msra.mxu0 0.0
    %165 = vmatprep.subr.mxu0 0.0
    %166 = vmatpush1.msra.mxu0 0.0
    %167 = vmatprep.subr.mxu0 0.0
    %168 = vmatpush1.msra.mxu0 0.0
    %169 = vmatprep.subr.mxu0 0.0
    %170 = vmatpush1.msra.mxu0 0.0
    %171 = vmatprep.subr.mxu0 0.0
    %172 = vmatpush1.msra.mxu0 0.0
    %173 = vmatprep.subr.mxu0 0.0
    %174 = vmatpush1.msra.mxu0 0.0
    %175 = vmatprep.subr.mxu0 0.0
    %176 = vmatpush1.msra.mxu0 0.0
    %177 = vmatprep.subr.mxu0 0.0
    %178 = vmatpush1.msra.mxu0 0.0
    %179 = vmatprep.subr.mxu0 0.0
    %180 = vmatpush1.msra.mxu0 0.0
    %181 = vmatprep.subr.mxu0 0.0
    %182 = vmatpush1.msra.mxu0 0.0
    %183 = vmatprep.subr.mxu0 0.0
    %184 = vmatpush1.msra.mxu0 0.0
    %185 = vmatprep.subr.mxu0 0.0
    %186 = vmatpush1.msra.mxu0 0.0
    %187 = vmatprep.subr.mxu0 0.0
    %188 = vmatpush1.msra.mxu0 0.0
    %189 = vmatprep.subr.mxu0 0.0
    %190 = vmatpush1.msra.mxu0 0.0
    %191 = vmatprep.subr.mxu0 0.0
    %192 = vmatpush1.msra.mxu0 0.0
    %193 = vmatprep.subr.mxu0 0.0
    %194 = vmatpush1.msra.mxu0 0.0
    %195 = vmatprep.subr.mxu0 0.0
    %196 = vmatpush1.msra.mxu0 0.0
    %197 = vmatprep.mubr.f32.mxu0 0.0
    %198 = vmatmul.mubr.f32.gmra.mrb[0].mxu0 %v128
    %v199 = vpop.f32.mrb[0].mxu0
    %v200 = vadd.f32 %v119, %v199
    %v201 = vpop.f32.mrb[0].mxu0
    %202 = vmatprep.mubr.f32.mxu0 0.0
    %203 = vmatmul.mubr.f32.gmra.mrb[0].mxu0 %v131
    %v204 = vpop.f32.mrb[0].mxu0
    %v205 = vadd.f32 %v124, %v204
    %v206 = vpop.f32.mrb[0].mxu0
    %207 = vdwg.mxu0
    %v208 = vmax.f32 %v200, 0.0
    %v209 = vmax.f32 %v205, 0.0
    %v210 = vld [vmem:[%s5] sm:$0x1]
    %v211 = vld [vmem:[#allocation2] sm:$0x1]
    %213 = vset.pattern.permute.xlu0 0
    %214 = vperm.xlu0 %213, %v211
    %v215 = vpop.permute.xlu0 %214
    %v217 = vlaneseq
    %v218 = vshrl.u32 %v217, 7
    %v219 = vsub.s32 0, %v218
    %v220 = vrot.slane %v215, %v219
    %v222 = vsel %vm126, %v210, 0
    %224 = vmatprep.subr.mxu0 0.0
    %225 = vmatpush1.msra.mxu0 %v208
    %226 = vmatprep.subr.mxu0 0.0
    %227 = vmatpush1.msra.mxu0 %v209
    %228 = vmatprep.subr.mxu0 0.0
    %229 = vmatpush1.msra.mxu0 0.0
    %230 = vmatprep.subr.mxu0 0.0
    %231 = vmatpush1.msra.mxu0 0.0
    %232 = vmatprep.subr.mxu0 0.0
    %233 = vmatpush1.msra.mxu0 0.0
    %234 = vmatprep.subr.mxu0 0.0
    %235 = vmatpush1.msra.mxu0 0.0
    %236 = vmatprep.subr.mxu0 0.0
    %237 = vmatpush1.msra.mxu0 0.0
    %238 = vmatprep.subr.mxu0 0.0
    %239 = vmatpush1.msra.mxu0 0.0
    %240 = vmatprep.subr.mxu0 0.0
    %241 = vmatpush1.msra.mxu0 0.0
    %242 = vmatprep.subr.mxu0 0.0
    %243 = vmatpush1.msra.mxu0 0.0
    %244 = vmatprep.subr.mxu0 0.0
    %245 = vmatpush1.msra.mxu0 0.0
    %246 = vmatprep.subr.mxu0 0.0
    %247 = vmatpush1.msra.mxu0 0.0
    %248 = vmatprep.subr.mxu0 0.0
    %249 = vmatpush1.msra.mxu0 0.0
    %250 = vmatprep.subr.mxu0 0.0
    %251 = vmatpush1.msra.mxu0 0.0
    %252 = vmatprep.subr.mxu0 0.0
    %253 = vmatpush1.msra.mxu0 0.0
    %254 = vmatprep.subr.mxu0 0.0
    %255 = vmatpush1.msra.mxu0 0.0
    %256 = vmatprep.subr.mxu0 0.0
    %257 = vmatpush1.msra.mxu0 0.0
    %258 = vmatprep.subr.mxu0 0.0
    %259 = vmatpush1.msra.mxu0 0.0
    %260 = vmatprep.subr.mxu0 0.0
    %261 = vmatpush1.msra.mxu0 0.0
    %262 = vmatprep.subr.mxu0 0.0
    %263 = vmatpush1.msra.mxu0 0.0
    %264 = vmatprep.subr.mxu0 0.0
    %265 = vmatpush1.msra.mxu0 0.0
    %266 = vmatprep.subr.mxu0 0.0
    %267 = vmatpush1.msra.mxu0 0.0
    %268 = vmatprep.subr.mxu0 0.0
    %269 = vmatpush1.msra.mxu0 0.0
    %270 = vmatprep.subr.mxu0 0.0
    %271 = vmatpush1.msra.mxu0 0.0
    %272 = vmatprep.subr.mxu0 0.0
    %273 = vmatpush1.msra.mxu0 0.0
    %274 = vmatprep.subr.mxu0 0.0
    %275 = vmatpush1.msra.mxu0 0.0
    %276 = vmatprep.subr.mxu0 0.0
    %277 = vmatpush1.msra.mxu0 0.0
    %278 = vmatprep.subr.mxu0 0.0
    %279 = vmatpush1.msra.mxu0 0.0
    %280 = vmatprep.subr.mxu0 0.0
    %281 = vmatpush1.msra.mxu0 0.0
    %282 = vmatprep.subr.mxu0 0.0
    %283 = vmatpush1.msra.mxu0 0.0
    %284 = vmatprep.subr.mxu0 0.0
    %285 = vmatpush1.msra.mxu0 0.0
    %286 = vmatprep.subr.mxu0 0.0
    %287 = vmatpush1.msra.mxu0 0.0
    %288 = vmatprep.mubr.f32.mxu0 0.0
    %289 = vmatmul.mubr.f32.gmra.mrb[0].mxu0 %v222
    %v290 = vpop.f32.mrb[0].mxu0
    %v291 = vadd.f32 %v220, %v290
    %v292 = vpop.f32.mrb[0].mxu0
    %293 = vdwg.mxu0
    %294 = vst [vmem:[#allocation3] sm:$0x1] %v291
    // Predicated region
    $region30: #{tpu_custom_call.1} parent=1 // pred_check
      _
    $region31: #{tpu_custom_call.1} parent=1 // pred_check_branch
      %296 = sbr.rel (0) target = $region33
    $region32: #{tpu_custom_call.1} parent=1 // pred_region
      %s298 = ssub.s32 16, 16
      %299 = vsyncadd [#allocation4], %s298
      %s301 = sshll.u32 [#allocation3], 4
      %s302 = int_to_ptr.vmem [resolvable:$true] %s301
      %304 = dma.vmem_to_hbm [thread:$0]  %s302, 16, %s7, [#allocation4]
    $region33: #{tpu_custom_call.1} parent=1 // pred_fallthru
      _
    // Predicated region
    $region34: #{tpu_custom_call.1} parent=1 // pred_check
      _
    $region35: #{tpu_custom_call.1} parent=1 // pred_check_branch
      %306 = sbr.rel (0) target = $region37
    $region36: #{tpu_custom_call.1} parent=1 // pred_region
      %307 = dma.done [#allocation4], 16
    $region37: #{tpu_custom_call.1} parent=1 // pred_fallthru
      _
    %308 = vsyncpa [#allocation4], 1

</llo_original>
